<compile_context>
chip_gen: v7x
topology: tpu7x:2x2x1
jax: 0.10.0
libtpu: 0.0.40
codegen_flags: <defaults>
</compile_context>

<pallas_src>
import jax
import jax.numpy as jnp
from jax import lax
from jax.experimental import pallas as pl
from jax.experimental.pallas import tpu as pltpu


def _make_kernel(NB, H, W, Cin, Cout, hidden, stride, has_expand, use_res,
                 Hout, Wout):
    Wh = W * hidden
    WCin = W * Cin
    WoCout = Wout * Cout
    NBH = NB * H

    def kernel(*refs):
        it = iter(refs)
        x_ref = next(it)
        if has_expand:
            w1_ref, b1_ref, a1_ref = next(it), next(it), next(it)
        kdw_ref, b2_ref, a2_ref = next(it), next(it), next(it)
        w3_ref, b3_ref, a3_ref = next(it), next(it), next(it)
        if stride == 2:
            srow_ref = next(it)
        o_ref = next(it)

        # (NB, H, W*Cin) -> (NB*H, W*Cin): leading-dim merge only (layout safe).
        x = x_ref[...].reshape(NBH, WCin)

        # ---- stage 1: 1x1 expand conv + BN(shift) + PReLU  (BN scale folded) ----
        if has_expand:
            h = jnp.dot(x, w1_ref[...], preferred_element_type=jnp.float32)
            h = h + b1_ref[...]
            h = jnp.where(h >= 0, h, a1_ref[...] * h)
        else:
            h = x  # hidden == Cin, Wh == WCin

        # ---- stage 2: 3x3 depthwise conv (pad=1) fully on register values -------
        # zero-pad W (lane axis, by `hidden` lanes) and H (sublane axis, per image)
        h3 = h.reshape(NB, H, Wh)                       # leading split: layout safe
        zc = jnp.zeros((NB, H, hidden), jnp.float32)
        hp = jnp.concatenate([zc, h3, zc], axis=2)      # (NB, H,   Wh + 2*hidden)
        zr = jnp.zeros((NB, 1, Wh + 2 * hidden), jnp.float32)
        hp = jnp.concatenate([zr, hp, zr], axis=1)      # (NB, H+2, Wh + 2*hidden)

        kdw = kdw_ref[...]                              # (3, 3, W*hidden), scale folded
        acc = jnp.zeros((NB, H, Wh), jnp.float32)
        for di in range(3):
            for dj in range(3):
                win = hp[:, di:di + H, dj * hidden:dj * hidden + Wh]
                acc = acc + win * kdw[di, dj].reshape(1, 1, Wh)

        h2 = acc.reshape(NBH, Wh) + b2_ref[...]
        h2 = jnp.where(h2 >= 0, h2, a2_ref[...] * h2)

        # ---- stride-2: row subsample via a tiny selection matmul (no strided reads)
        if stride == 2:
            h2 = jnp.dot(srow_ref[...], h2, preferred_element_type=jnp.float32)

        # ---- stage 3: 1x1 projection (stride-2 column subsample folded in weight) -
        y = jnp.dot(h2, w3_ref[...], preferred_element_type=jnp.float32)
        y = y + b3_ref[...]
        y = jnp.where(y >= 0, y, a3_ref[...] * y)

        if use_res:
            y = y + x

        o_ref[...] = y.reshape(NB, Hout, WoCout)        # leading split: layout safe

    return kernel


def inverted_block_pallas(x_nchw, params, *, expand_ratio, stride, ch_out,
                          images_per_block=1):
    assert stride in (1, 2)
    f32 = jnp.float32
    x = jnp.transpose(x_nchw, (0, 2, 3, 1)).astype(f32)        # NHWC
    N, H, W, Cin = x.shape
    hidden = Cin * expand_ratio
    has_expand = expand_ratio != 1
    use_res = (stride == 1) and (Cin == ch_out)
    Hout = (H + 2 - 3) // stride + 1
    Wout = (W + 2 - 3) // stride + 1
    NB = images_per_block
    assert N % NB == 0, "images_per_block must divide the batch"
    grid = (N // NB,)

    def pc_slope(a, c):    # PReLU slope (scalar or per-channel) -> (c,) vector
        return jnp.broadcast_to(jnp.asarray(a, f32).reshape(-1), (c,))

    # ---- input presented as a lane-dense (N, H, W*Cin) slab -------------------
    args = [x.reshape(N, H, W * Cin)]
    in_specs = [pl.BlockSpec((NB, H, W * Cin), lambda n: (n, 0, 0))]

    def add_full(a):
        a = a.astype(f32)
        r = a.ndim
        args.append(a)
        in_specs.append(pl.BlockSpec(a.shape, lambda n, _r=r: (0,) * _r))

    eyeW = jnp.eye(W, dtype=f32)

    # ---- fold BN scales into the conv weights at trace time (outside kernel) --
    if has_expand:
        w1 = params['w1'].astype(f32) * params['s1'].astype(f32)[None, :]
        add_full(jnp.kron(eyeW, w1))                                 # (W*Cin, W*hidden)
        add_full(jnp.tile(params['b1'].astype(f32), W)[None, :])     # (1, W*hidden)
        add_full(jnp.tile(pc_slope(params['a1'], hidden), W)[None, :])

    kdw = params['dw'].astype(f32) * params['s2'].astype(f32)[None, None, :]
    add_full(jnp.tile(kdw, (1, 1, W)))                               # (3, 3, W*hidden)
    add_full(jnp.tile(params['b2'].astype(f32), W)[None, :])
    add_full(jnp.tile(pc_slope(params['a2'], hidden), W)[None, :])

    w3 = params['w3'].astype(f32) * params['s3'].astype(f32)[None, :]
    col_sel = eyeW if stride == 1 else eyeW[:, ::stride]             # (W, Wout)
    add_full(jnp.kron(col_sel, w3))                                  # (W*hidden, Wout*Cout)
    add_full(jnp.tile(params['b3'].astype(f32), Wout)[None, :])
    add_full(jnp.tile(pc_slope(params['a3'], ch_out), Wout)[None, :])

    if stride == 2:
        srow = jnp.kron(jnp.eye(NB, dtype=f32),
                        jnp.eye(H, dtype=f32)[::stride, :])          # (NB*Hout, NB*H)
        add_full(srow)

    kernel = _make_kernel(NB, H, W, Cin, ch_out, hidden, stride, has_expand,
                          use_res, Hout, Wout)

    out = pl.pallas_call(
        kernel,
        grid=grid,
        in_specs=in_specs,
        out_specs=pl.BlockSpec((NB, Hout, Wout * ch_out), lambda n: (n, 0, 0)),
        out_shape=jax.ShapeDtypeStruct((N, Hout, Wout * ch_out), f32),
        compiler_params=pltpu.CompilerParams(
            dimension_semantics=("parallel",),
            vmem_limit_bytes=32 * 1024 * 1024),
    )(*args)

    out = out.reshape(N, Hout, Wout, ch_out)
    return jnp.transpose(out, (0, 3, 1, 2))                          # back to NCHW


def inverted_block_ref(x_nchw, params, *, expand_ratio, stride, ch_out):
    """Pure-JAX reference (same math; lax.conv for the depthwise stage)."""
    x = jnp.transpose(x_nchw, (0, 2, 3, 1)).astype(jnp.float32)
    Cin = x.shape[-1]
    hidden = Cin * expand_ratio
    has_expand = expand_ratio != 1
    use_res = (stride == 1) and (Cin == ch_out)

    def prelu(v, a):
        return jnp.where(v >= 0, v, a * v)

    h = x
    if has_expand:
        h = jnp.einsum('nhwc,cd->nhwd', h, params['w1'])
        h = prelu(h * params['s1'] + params['b1'], params['a1'])
    kern = params['dw'].reshape(3, 3, 1, hidden)
    h = lax.conv_general_dilated(
        h, kern, (stride, stride), ((1, 1), (1, 1)),
        dimension_numbers=('NHWC', 'HWIO', 'NHWC'),
        feature_group_count=hidden)
    h = prelu(h * params['s2'] + params['b2'], params['a2'])
    y = jnp.einsum('nhwc,cd->nhwd', h, params['w3'])
    y = prelu(y * params['s3'] + params['b3'], params['a3'])
    if use_res:
        y = y + x
    return jnp.transpose(y, (0, 3, 1, 2))


if __name__ == "__main__":
    key = jax.random.PRNGKey(0)

    def bn_fold(k, c):
        # Deterministic non-trivial eval-mode BatchNorm, folded to scale/shift.
        kg, kb, km, kv = jax.random.split(k, 4)
        gamma = jax.random.uniform(kg, (c,), minval=0.5, maxval=1.5)
        beta = 0.1 * jax.random.normal(kb, (c,))
        mean = 0.1 * jax.random.normal(km, (c,))
        var = jax.random.uniform(kv, (c,), minval=0.5, maxval=1.5)
        scale = gamma / jnp.sqrt(var + 1e-5)
        shift = beta - mean * scale
        return scale.astype(jnp.float32), shift.astype(jnp.float32)

    def make_params(k, ch_in, ch_out, expand_ratio):
        hidden = ch_in * expand_ratio
        ks = jax.random.split(k, 9)
        s1, b1 = bn_fold(ks[0], hidden)
        s2, b2 = bn_fold(ks[1], hidden)
        s3, b3 = bn_fold(ks[2], ch_out)
        return dict(
            w1=(0.3 * jax.random.normal(ks[3], (ch_in, hidden))).astype(jnp.float32),
            dw=(0.3 * jax.random.normal(ks[4], (3, 3, hidden))).astype(jnp.float32),
            w3=(0.3 * jax.random.normal(ks[5], (hidden, ch_out))).astype(jnp.float32),
            s1=s1, b1=b1, s2=s2, b2=b2, s3=s3, b3=b3,
            # PReLU slopes (PyTorch default init is 0.25; per-channel supported).
            a1=jax.random.uniform(ks[6], (hidden,), minval=0.1, maxval=0.4),
            a2=jax.random.uniform(ks[7], (hidden,), minval=0.1, maxval=0.4),
            a3=jax.random.uniform(ks[8], (ch_out,), minval=0.1, maxval=0.4),
        )

    N, Cin, H, W = 2, 4, 16, 16
    kx, kp1, kp2 = jax.random.split(key, 3)
    x = jax.random.normal(kx, (N, Cin, H, W), dtype=jnp.float32)  # NCHW like PyTorch

    # (ch_out, expand_ratio, stride, images_per_block, params_key)
    configs = [
        (4, 4, 1, 1, kp1),   # residual path, 2 parallel grid steps
        (4, 4, 1, 2, kp1),   # whole batch in a single grid step
        (8, 4, 2, 1, kp2),   # stride-2 path (selection-matmul subsampling)
    ]
    for ch_out, er, stride, nb, kp in configs:
        params = make_params(kp, Cin, ch_out, er)
        out = inverted_block_pallas(x, params, expand_ratio=er, stride=stride,
                                    ch_out=ch_out, images_per_block=nb)
        out = jax.block_until_ready(out)
        ref = inverted_block_ref(x, params, expand_ratio=er, stride=stride,
                                 ch_out=ch_out)
        assert out.shape == ref.shape
        if not jnp.allclose(out, ref, atol=1e-3, rtol=1e-3):
            raise AssertionError(
                f"mismatch (ch_out={ch_out}, stride={stride}, nb={nb}): "
                f"max abs diff = {float(jnp.max(jnp.abs(out - ref)))}")

    # TODO(synk): BatchNorm is folded as eval-mode scale/shift only; training-mode
    # batch statistics are out of scope for this fused inference kernel.
    print("KERNEL_OK")
</pallas_src>

<mosaic_0001>
module attributes {stable_mosaic.version = 11 : i64} {
  func.func @kernel(%arg0: i32, %arg1: memref<1x16x64xf32, #tpu.memory_space<vmem>>, %arg2: memref<64x256xf32, #tpu.memory_space<vmem>>, %arg3: memref<1x256xf32, #tpu.memory_space<vmem>>, %arg4: memref<1x256xf32, #tpu.memory_space<vmem>>, %arg5: memref<3x3x256xf32, #tpu.memory_space<vmem>>, %arg6: memref<1x256xf32, #tpu.memory_space<vmem>>, %arg7: memref<1x256xf32, #tpu.memory_space<vmem>>, %arg8: memref<256x64xf32, #tpu.memory_space<vmem>>, %arg9: memref<1x64xf32, #tpu.memory_space<vmem>>, %arg10: memref<1x64xf32, #tpu.memory_space<vmem>>, %arg11: memref<1x16x64xf32, #tpu.memory_space<vmem>>) attributes {dimension_semantics = [#tpu.dimension_semantics<parallel>], iteration_bounds = array<i64: 2>, scalar_prefetch = 0 : i64, scratch_operands = 0 : i64, tpu.core_type = #tpu.core_type<tc>, window_params = [{transform_indices = @transform_0, window_bounds = array<i64: 1, 16, 64>}, {pipeline_mode = #tpu.pipeline_mode<synchronous>, transform_indices = @transform_1, window_bounds = array<i64: 64, 256>}, {pipeline_mode = #tpu.pipeline_mode<synchronous>, transform_indices = @transform_2, window_bounds = array<i64: 1, 256>}, {pipeline_mode = #tpu.pipeline_mode<synchronous>, transform_indices = @transform_3, window_bounds = array<i64: 1, 256>}, {pipeline_mode = #tpu.pipeline_mode<synchronous>, transform_indices = @transform_4, window_bounds = array<i64: 3, 3, 256>}, {pipeline_mode = #tpu.pipeline_mode<synchronous>, transform_indices = @transform_5, window_bounds = array<i64: 1, 256>}, {pipeline_mode = #tpu.pipeline_mode<synchronous>, transform_indices = @transform_6, window_bounds = array<i64: 1, 256>}, {pipeline_mode = #tpu.pipeline_mode<synchronous>, transform_indices = @transform_7, window_bounds = array<i64: 256, 64>}, {pipeline_mode = #tpu.pipeline_mode<synchronous>, transform_indices = @transform_8, window_bounds = array<i64: 1, 64>}, {pipeline_mode = #tpu.pipeline_mode<synchronous>, transform_indices = @transform_9, window_bounds = array<i64: 1, 64>}, {transform_indices = @transform_10, window_bounds = array<i64: 1, 16, 64>}]} {
    %c0 = arith.constant 0 : index
    %c0_0 = arith.constant 0 : index
    %c0_1 = arith.constant 0 : index
    %0 = vector.load %arg1[%c0, %c0_0, %c0_1] : memref<1x16x64xf32, #tpu.memory_space<vmem>>, vector<1x16x64xf32>
    %1 = vector.shape_cast %0 : vector<1x16x64xf32> to vector<16x64xf32>
    %c0_2 = arith.constant 0 : index
    %c0_3 = arith.constant 0 : index
    %2 = vector.load %arg2[%c0_2, %c0_3] : memref<64x256xf32, #tpu.memory_space<vmem>>, vector<64x256xf32>
    %cst = arith.constant dense<0.000000e+00> : vector<16x256xf32>
    %3 = tpu.matmul %1, %2, %cst {dimension_numbers = #tpu.dot_dimension_numbers<[1], [0], [0], [1], [0, 0, 1, 1], [], []>} : vector<16x64xf32>, vector<64x256xf32>, vector<16x256xf32> -> vector<16x256xf32>
    %c0_4 = arith.constant 0 : index
    %c0_5 = arith.constant 0 : index
    %4 = vector.load %arg3[%c0_4, %c0_5] : memref<1x256xf32, #tpu.memory_space<vmem>>, vector<1x256xf32>
    %5 = vector.broadcast %4 : vector<1x256xf32> to vector<16x256xf32>
    %6 = arith.addf %3, %5 : vector<16x256xf32>
    %cst_6 = arith.constant 0.000000e+00 : f32
    %7 = vector.broadcast %cst_6 : f32 to vector<16x256xf32>
    %8 = arith.cmpf oge, %6, %7 : vector<16x256xf32>
    %c0_7 = arith.constant 0 : index
    %c0_8 = arith.constant 0 : index
    %9 = vector.load %arg4[%c0_7, %c0_8] : memref<1x256xf32, #tpu.memory_space<vmem>>, vector<1x256xf32>
    %10 = vector.broadcast %9 : vector<1x256xf32> to vector<16x256xf32>
    %11 = arith.mulf %10, %6 : vector<16x256xf32>
    %12 = arith.select %8, %6, %11 : vector<16x256xi1>, vector<16x256xf32>
    %13 = vector.shape_cast %12 : vector<16x256xf32> to vector<1x16x256xf32>
    %cst_9 = arith.constant 0.000000e+00 : f32
    %14 = vector.broadcast %cst_9 : f32 to vector<1x16x16xf32>
    %15 = tpu.concatenate %14, %13, %14 in 2 : vector<1x16x16xf32>, vector<1x16x256xf32>, vector<1x16x16xf32> -> vector<1x16x288xf32>
    %cst_10 = arith.constant 0.000000e+00 : f32
    %16 = vector.broadcast %cst_10 : f32 to vector<1x1x288xf32>
    %17 = tpu.concatenate %16, %15, %16 in 1 : vector<1x1x288xf32>, vector<1x16x288xf32>, vector<1x1x288xf32> -> vector<1x18x288xf32>
    %c0_11 = arith.constant 0 : index
    %c0_12 = arith.constant 0 : index
    %c0_13 = arith.constant 0 : index
    %18 = vector.load %arg5[%c0_11, %c0_12, %c0_13] : memref<3x3x256xf32, #tpu.memory_space<vmem>>, vector<3x3x256xf32>
    %cst_14 = arith.constant 0.000000e+00 : f32
    %19 = vector.broadcast %cst_14 : f32 to vector<1x16x256xf32>
    %20 = vector.extract_strided_slice %17 {offsets = [0, 0, 0], sizes = [1, 16, 256], strides = [1, 1, 1]} : vector<1x18x288xf32> to vector<1x16x256xf32>
    %21 = vector.extract_strided_slice %18 {offsets = [0, 0, 0], sizes = [1, 1, 256], strides = [1, 1, 1]} : vector<3x3x256xf32> to vector<1x1x256xf32>
    %22 = vector.shape_cast %21 : vector<1x1x256xf32> to vector<256xf32>
    %23 = vector.shape_cast %22 : vector<256xf32> to vector<1x1x256xf32>
    %24 = vector.broadcast %23 : vector<1x1x256xf32> to vector<1x16x256xf32>
    %25 = arith.mulf %20, %24 : vector<1x16x256xf32>
    %26 = arith.addf %19, %25 : vector<1x16x256xf32>
    %27 = vector.extract_strided_slice %17 {offsets = [0, 0, 16], sizes = [1, 16, 256], strides = [1, 1, 1]} : vector<1x18x288xf32> to vector<1x16x256xf32>
    %28 = vector.extract_strided_slice %18 {offsets = [0, 1, 0], sizes = [1, 1, 256], strides = [1, 1, 1]} : vector<3x3x256xf32> to vector<1x1x256xf32>
    %29 = vector.shape_cast %28 : vector<1x1x256xf32> to vector<256xf32>
    %30 = vector.shape_cast %29 : vector<256xf32> to vector<1x1x256xf32>
    %31 = vector.broadcast %30 : vector<1x1x256xf32> to vector<1x16x256xf32>
    %32 = arith.mulf %27, %31 : vector<1x16x256xf32>
    %33 = arith.addf %26, %32 : vector<1x16x256xf32>
    %34 = vector.extract_strided_slice %17 {offsets = [0, 0, 32], sizes = [1, 16, 256], strides = [1, 1, 1]} : vector<1x18x288xf32> to vector<1x16x256xf32>
    %35 = vector.extract_strided_slice %18 {offsets = [0, 2, 0], sizes = [1, 1, 256], strides = [1, 1, 1]} : vector<3x3x256xf32> to vector<1x1x256xf32>
    %36 = vector.shape_cast %35 : vector<1x1x256xf32> to vector<256xf32>
    %37 = vector.shape_cast %36 : vector<256xf32> to vector<1x1x256xf32>
    %38 = vector.broadcast %37 : vector<1x1x256xf32> to vector<1x16x256xf32>
    %39 = arith.mulf %34, %38 : vector<1x16x256xf32>
    %40 = arith.addf %33, %39 : vector<1x16x256xf32>
    %41 = vector.extract_strided_slice %17 {offsets = [0, 1, 0], sizes = [1, 16, 256], strides = [1, 1, 1]} : vector<1x18x288xf32> to vector<1x16x256xf32>
    %42 = vector.extract_strided_slice %18 {offsets = [1, 0, 0], sizes = [1, 1, 256], strides = [1, 1, 1]} : vector<3x3x256xf32> to vector<1x1x256xf32>
    %43 = vector.shape_cast %42 : vector<1x1x256xf32> to vector<256xf32>
    %44 = vector.shape_cast %43 : vector<256xf32> to vector<1x1x256xf32>
    %45 = vector.broadcast %44 : vector<1x1x256xf32> to vector<1x16x256xf32>
    %46 = arith.mulf %41, %45 : vector<1x16x256xf32>
    %47 = arith.addf %40, %46 : vector<1x16x256xf32>
    %48 = vector.extract_strided_slice %17 {offsets = [0, 1, 16], sizes = [1, 16, 256], strides = [1, 1, 1]} : vector<1x18x288xf32> to vector<1x16x256xf32>
    %49 = vector.extract_strided_slice %18 {offsets = [1, 1, 0], sizes = [1, 1, 256], strides = [1, 1, 1]} : vector<3x3x256xf32> to vector<1x1x256xf32>
    %50 = vector.shape_cast %49 : vector<1x1x256xf32> to vector<256xf32>
    %51 = vector.shape_cast %50 : vector<256xf32> to vector<1x1x256xf32>
    %52 = vector.broadcast %51 : vector<1x1x256xf32> to vector<1x16x256xf32>
    %53 = arith.mulf %48, %52 : vector<1x16x256xf32>
    %54 = arith.addf %47, %53 : vector<1x16x256xf32>
    %55 = vector.extract_strided_slice %17 {offsets = [0, 1, 32], sizes = [1, 16, 256], strides = [1, 1, 1]} : vector<1x18x288xf32> to vector<1x16x256xf32>
    %56 = vector.extract_strided_slice %18 {offsets = [1, 2, 0], sizes = [1, 1, 256], strides = [1, 1, 1]} : vector<3x3x256xf32> to vector<1x1x256xf32>
    %57 = vector.shape_cast %56 : vector<1x1x256xf32> to vector<256xf32>
    %58 = vector.shape_cast %57 : vector<256xf32> to vector<1x1x256xf32>
    %59 = vector.broadcast %58 : vector<1x1x256xf32> to vector<1x16x256xf32>
    %60 = arith.mulf %55, %59 : vector<1x16x256xf32>
    %61 = arith.addf %54, %60 : vector<1x16x256xf32>
    %62 = vector.extract_strided_slice %17 {offsets = [0, 2, 0], sizes = [1, 16, 256], strides = [1, 1, 1]} : vector<1x18x288xf32> to vector<1x16x256xf32>
    %63 = vector.extract_strided_slice %18 {offsets = [2, 0, 0], sizes = [1, 1, 256], strides = [1, 1, 1]} : vector<3x3x256xf32> to vector<1x1x256xf32>
    %64 = vector.shape_cast %63 : vector<1x1x256xf32> to vector<256xf32>
    %65 = vector.shape_cast %64 : vector<256xf32> to vector<1x1x256xf32>
    %66 = vector.broadcast %65 : vector<1x1x256xf32> to vector<1x16x256xf32>
    %67 = arith.mulf %62, %66 : vector<1x16x256xf32>
    %68 = arith.addf %61, %67 : vector<1x16x256xf32>
    %69 = vector.extract_strided_slice %17 {offsets = [0, 2, 16], sizes = [1, 16, 256], strides = [1, 1, 1]} : vector<1x18x288xf32> to vector<1x16x256xf32>
    %70 = vector.extract_strided_slice %18 {offsets = [2, 1, 0], sizes = [1, 1, 256], strides = [1, 1, 1]} : vector<3x3x256xf32> to vector<1x1x256xf32>
    %71 = vector.shape_cast %70 : vector<1x1x256xf32> to vector<256xf32>
    %72 = vector.shape_cast %71 : vector<256xf32> to vector<1x1x256xf32>
    %73 = vector.broadcast %72 : vector<1x1x256xf32> to vector<1x16x256xf32>
    %74 = arith.mulf %69, %73 : vector<1x16x256xf32>
    %75 = arith.addf %68, %74 : vector<1x16x256xf32>
    %76 = vector.extract_strided_slice %17 {offsets = [0, 2, 32], sizes = [1, 16, 256], strides = [1, 1, 1]} : vector<1x18x288xf32> to vector<1x16x256xf32>
    %77 = vector.extract_strided_slice %18 {offsets = [2, 2, 0], sizes = [1, 1, 256], strides = [1, 1, 1]} : vector<3x3x256xf32> to vector<1x1x256xf32>
    %78 = vector.shape_cast %77 : vector<1x1x256xf32> to vector<256xf32>
    %79 = vector.shape_cast %78 : vector<256xf32> to vector<1x1x256xf32>
    %80 = vector.broadcast %79 : vector<1x1x256xf32> to vector<1x16x256xf32>
    %81 = arith.mulf %76, %80 : vector<1x16x256xf32>
    %82 = arith.addf %75, %81 : vector<1x16x256xf32>
    %83 = vector.shape_cast %82 : vector<1x16x256xf32> to vector<16x256xf32>
    %c0_15 = arith.constant 0 : index
    %c0_16 = arith.constant 0 : index
    %84 = vector.load %arg6[%c0_15, %c0_16] : memref<1x256xf32, #tpu.memory_space<vmem>>, vector<1x256xf32>
    %85 = vector.broadcast %84 : vector<1x256xf32> to vector<16x256xf32>
    %86 = arith.addf %83, %85 : vector<16x256xf32>
    %cst_17 = arith.constant 0.000000e+00 : f32
    %87 = vector.broadcast %cst_17 : f32 to vector<16x256xf32>
    %88 = arith.cmpf oge, %86, %87 : vector<16x256xf32>
    %c0_18 = arith.constant 0 : index
    %c0_19 = arith.constant 0 : index
    %89 = vector.load %arg7[%c0_18, %c0_19] : memref<1x256xf32, #tpu.memory_space<vmem>>, vector<1x256xf32>
    %90 = vector.broadcast %89 : vector<1x256xf32> to vector<16x256xf32>
    %91 = arith.mulf %90, %86 : vector<16x256xf32>
    %92 = arith.select %88, %86, %91 : vector<16x256xi1>, vector<16x256xf32>
    %c0_20 = arith.constant 0 : index
    %c0_21 = arith.constant 0 : index
    %93 = vector.load %arg8[%c0_20, %c0_21] : memref<256x64xf32, #tpu.memory_space<vmem>>, vector<256x64xf32>
    %cst_22 = arith.constant dense<0.000000e+00> : vector<16x64xf32>
    %94 = tpu.matmul %92, %93, %cst_22 {dimension_numbers = #tpu.dot_dimension_numbers<[1], [0], [0], [1], [0, 0, 1, 1], [], []>} : vector<16x256xf32>, vector<256x64xf32>, vector<16x64xf32> -> vector<16x64xf32>
    %c0_23 = arith.constant 0 : index
    %c0_24 = arith.constant 0 : index
    %95 = vector.load %arg9[%c0_23, %c0_24] : memref<1x64xf32, #tpu.memory_space<vmem>>, vector<1x64xf32>
    %96 = vector.broadcast %95 : vector<1x64xf32> to vector<16x64xf32>
    %97 = arith.addf %94, %96 : vector<16x64xf32>
    %cst_25 = arith.constant 0.000000e+00 : f32
    %98 = vector.broadcast %cst_25 : f32 to vector<16x64xf32>
    %99 = arith.cmpf oge, %97, %98 : vector<16x64xf32>
    %c0_26 = arith.constant 0 : index
    %c0_27 = arith.constant 0 : index
    %100 = vector.load %arg10[%c0_26, %c0_27] : memref<1x64xf32, #tpu.memory_space<vmem>>, vector<1x64xf32>
    %101 = vector.broadcast %100 : vector<1x64xf32> to vector<16x64xf32>
    %102 = arith.mulf %101, %97 : vector<16x64xf32>
    %103 = arith.select %99, %97, %102 : vector<16x64xi1>, vector<16x64xf32>
    %104 = arith.addf %103, %1 : vector<16x64xf32>
    %105 = vector.shape_cast %104 : vector<16x64xf32> to vector<1x16x64xf32>
    %c0_28 = arith.constant 0 : index
    %c0_29 = arith.constant 0 : index
    %c0_30 = arith.constant 0 : index
    %106 = vector.load %arg11[%c0_28, %c0_29, %c0_30] : memref<1x16x64xf32, #tpu.memory_space<vmem>>, vector<1x16x64xf32>
    tpu.vector_store %arg11[%c0_28, %c0_29, %c0_30], %105 {strides = array<i32>} : memref<1x16x64xf32, #tpu.memory_space<vmem>>, vector<1x16x64xf32>,
    return
  }
  func.func @transform_0(%arg0: i32) -> (i32, i32, i32) {
    %c0_i32 = arith.constant 0 : i32
    %c0_i32_0 = arith.constant 0 : i32
    %c0_i32_1 = arith.constant 0 : i32
    return %arg0, %c0_i32, %c0_i32_0 : i32, i32, i32
  }
  func.func @transform_1(%arg0: i32) -> (i32, i32) {
    %c0_i32 = arith.constant 0 : i32
    %c0_i32_0 = arith.constant 0 : i32
    %c0_i32_1 = arith.constant 0 : i32
    return %c0_i32, %c0_i32_0 : i32, i32
  }
  func.func @transform_2(%arg0: i32) -> (i32, i32) {
    %c0_i32 = arith.constant 0 : i32
    %c0_i32_0 = arith.constant 0 : i32
    %c0_i32_1 = arith.constant 0 : i32
    return %c0_i32, %c0_i32_0 : i32, i32
  }
  func.func @transform_3(%arg0: i32) -> (i32, i32) {
    %c0_i32 = arith.constant 0 : i32
    %c0_i32_0 = arith.constant 0 : i32
    %c0_i32_1 = arith.constant 0 : i32
    return %c0_i32, %c0_i32_0 : i32, i32
  }
  func.func @transform_4(%arg0: i32) -> (i32, i32, i32) {
    %c0_i32 = arith.constant 0 : i32
    %c0_i32_0 = arith.constant 0 : i32
    %c0_i32_1 = arith.constant 0 : i32
    %c0_i32_2 = arith.constant 0 : i32
    return %c0_i32, %c0_i32_0, %c0_i32_1 : i32, i32, i32
  }
  func.func @transform_5(%arg0: i32) -> (i32, i32) {
    %c0_i32 = arith.constant 0 : i32
    %c0_i32_0 = arith.constant 0 : i32
    %c0_i32_1 = arith.constant 0 : i32
    return %c0_i32, %c0_i32_0 : i32, i32
  }
  func.func @transform_6(%arg0: i32) -> (i32, i32) {
    %c0_i32 = arith.constant 0 : i32
    %c0_i32_0 = arith.constant 0 : i32
    %c0_i32_1 = arith.constant 0 : i32
    return %c0_i32, %c0_i32_0 : i32, i32
  }
  func.func @transform_7(%arg0: i32) -> (i32, i32) {
    %c0_i32 = arith.constant 0 : i32
    %c0_i32_0 = arith.constant 0 : i32
    %c0_i32_1 = arith.constant 0 : i32
    return %c0_i32, %c0_i32_0 : i32, i32
  }
  func.func @transform_8(%arg0: i32) -> (i32, i32) {
    %c0_i32 = arith.constant 0 : i32
    %c0_i32_0 = arith.constant 0 : i32
    %c0_i32_1 = arith.constant 0 : i32
    return %c0_i32, %c0_i32_0 : i32, i32
  }
  func.func @transform_9(%arg0: i32) -> (i32, i32) {
    %c0_i32 = arith.constant 0 : i32
    %c0_i32_0 = arith.constant 0 : i32
    %c0_i32_1 = arith.constant 0 : i32
    return %c0_i32, %c0_i32_0 : i32, i32
  }
  func.func @transform_10(%arg0: i32) -> (i32, i32, i32) {
    %c0_i32 = arith.constant 0 : i32
    %c0_i32_0 = arith.constant 0 : i32
    %c0_i32_1 = arith.constant 0 : i32
    return %arg0, %c0_i32, %c0_i32_0 : i32, i32, i32
  }
}

</mosaic_0001>

<llo_original>
// kernel: tpu_custom_call.1
$region0: #{tpu_custom_call.1}
  #allocation0 [shape = 'u32[]', space=smem, size = 0x4, offset = 0x4, fixed_abs, tag = 'smem constant byte address 0x4 - core index']
  #allocation1 [shape = 'u32[144,128]{1,0:T(1,128)}', space=vmem, size = 0x12000, scoped, tag = 'internal scratch']
  %s0 = inlined_call_operand.vmem [shape: f32[2,16,64], index: 0, kind: input, shape index: {}]
  %s1 = inlined_call_operand.vmem [shape: f32[64,256], index: 1, kind: input, shape index: {}]
  %s2 = inlined_call_operand.vmem [shape: f32[1,256], index: 2, kind: input, shape index: {}]
  %s3 = inlined_call_operand.vmem [shape: f32[1,256], index: 3, kind: input, shape index: {}]
  %s4 = inlined_call_operand.vmem [shape: f32[3,3,256], index: 4, kind: input, shape index: {}]
  %s5 = inlined_call_operand.vmem [shape: f32[1,256], index: 5, kind: input, shape index: {}]
  %s6 = inlined_call_operand.vmem [shape: f32[1,256], index: 6, kind: input, shape index: {}]
  %s7 = inlined_call_operand.vmem [shape: f32[256,64], index: 7, kind: input, shape index: {}]
  %s8 = inlined_call_operand.vmem [shape: f32[1,64], index: 8, kind: input, shape index: {}]
  %s9 = inlined_call_operand.vmem [shape: f32[1,64], index: 9, kind: input, shape index: {}]
  %s10 = inlined_call_operand.hbm [shape: f32[2,16,64], index: 10, kind: output, shape index: {}]
  %s11 = sld [smem:[#allocation0]]
  $region73: #{tpu_custom_call.1} parent=0
    _
  %s13 = ssub.s32 1, %s11
  %s14 = scalar_select 0, %s13, %s11
  $region1: #{tpu_custom_call.1} parent=0
    #allocation2 [shape = 'u8[16384]{0}', space=vmem, size = 0x4000, scoped, tag = 'output window, operand 0']
    #allocation3 [shape = 's32[2]{0}', space=sflag, size = 0x8, scoped, tag = 'scoped memory for tpu_custom_call.1']
    %15 = vsyncpa [#allocation3], 0
    %s16 = scalar_lea.sflag [#allocation3], 1
    %17 = vsyncpa %s16, 0
    loop: start=0, step=1, limit=4
    $region2: #{tpu_custom_call.1} parent=1 // loop_pre_header
      _
    $region3: #{tpu_custom_call.1} parent=1 // loop_header
      %s19 = sphi 0, %s23
      %p20 = scmp.ge.s32.totalorder %s19, 4
      %s29 = sphi 0, %s31
      %s32 = sphi 0, %s29
      %s33 = sphi 0, %s32
      %s49 = sphi 0, %s33
      %s53 = sphi 0, %s53
      %s55 = sphi 0, %s53
      %s56 = sphi 0, %s55
      %s70 = sphi 0, %s56
      %s74 = sphi 0, %s74
      %s76 = sphi 0, %s74
      %s77 = sphi 0, %s76
      %s91 = sphi 0, %s77
      %s95 = sphi 0, %s95
      %s97 = sphi 0, %s95
      %s98 = sphi 0, %s97
      %s112 = sphi 0, %s98
      %s116 = sphi 0, %s116
      %s118 = sphi 0, %s116
      %s119 = sphi 0, %s118
      %s133 = sphi 0, %s119
      %s137 = sphi 0, %s137
      %s139 = sphi 0, %s137
      %s140 = sphi 0, %s139
      %s154 = sphi 0, %s140
      %s158 = sphi 0, %s158
      %s160 = sphi 0, %s158
      %s161 = sphi 0, %s160
      %s175 = sphi 0, %s161
      %s179 = sphi 0, %s179
      %s181 = sphi 0, %s179
      %s182 = sphi 0, %s181
      %s196 = sphi 0, %s182
      %s200 = sphi 0, %s200
      %s202 = sphi 0, %s200
      %s203 = sphi 0, %s202
      %s217 = sphi 0, %s203
      %s221 = sphi 0, %s221
      %s223 = sphi 0, %s221
      %s224 = sphi 0, %s223
      %s238 = sphi 0, %s224
      %s244 = sphi 0, %s246
      %s247 = sphi 0, %s244
      %s248 = sphi 0, %s247
      %s264 = sphi 0, %s248
    $region4: #{tpu_custom_call.1} parent=1 // loop_header_branch
      %22 = sbr.rel (%p20) target = $region8
    $region5: #{tpu_custom_call.1} parent=1 // loop_body
      %s24 = ssub.s32 %s19, 1
      %s25 = ssub.s32 %s19, 2
      %s26 = sadd.s32 %s19, 1
      %s27 = ssub.s32 %s19, %s26
      %p28 = scmp.eq.s32.totalorder %s27, 0
      %s30 = sadd.s32 %s29, 1
      %s31 = scalar_select %p28, %s29, %s30
      %p34 = pneg %p28
      %p35 = scmp.eq.s32.totalorder %s19, 1
      %p36 = por %p34, %p35
      %p37 = scmp.ne.s32.totalorder %s29, %s32
      %p38 = scmp.eq.s32.totalorder %s19, 0
      %p39 = por %p37, %p38
      %p40 = scmp.ne.s32.totalorder %s29, %s32
      %p41 = scmp.eq.s32.totalorder %s24, 1
      %p42 = por %p40, %p41
      %p43 = scmp.ne.s32.totalorder %s32, %s33
      %p44 = scmp.eq.s32.totalorder %s24, 0
      %p45 = por %p43, %p44
      %p46 = scmp.ne.s32.totalorder %s32, %s33
      %p47 = scmp.eq.s32.totalorder %s25, 1
      %p48 = por %p46, %p47
      %p50 = scmp.ne.s32.totalorder %s33, %s49
      %p51 = scmp.eq.s32.totalorder %s25, 0
      %p52 = por %p50, %p51
      %s54 = sadd.s32 %s53, 1
      %p57 = scmp.eq.s32.totalorder %s19, 1
      %p58 = scmp.ne.s32.totalorder %s53, %s55
      %p59 = scmp.eq.s32.totalorder %s19, 0
      %p60 = por %p58, %p59
      %p61 = scmp.ne.s32.totalorder %s53, %s55
      %p62 = scmp.eq.s32.totalorder %s24, 1
      %p63 = por %p61, %p62
      %p64 = scmp.ne.s32.totalorder %s55, %s56
      %p65 = scmp.eq.s32.totalorder %s24, 0
      %p66 = por %p64, %p65
      %p67 = scmp.ne.s32.totalorder %s55, %s56
      %p68 = scmp.eq.s32.totalorder %s25, 1
      %p69 = por %p67, %p68
      %p71 = scmp.ne.s32.totalorder %s56, %s70
      %p72 = scmp.eq.s32.totalorder %s25, 0
      %p73 = por %p71, %p72
      %s75 = sadd.s32 %s74, 1
      %p78 = scmp.eq.s32.totalorder %s19, 1
      %p79 = scmp.ne.s32.totalorder %s74, %s76
      %p80 = scmp.eq.s32.totalorder %s19, 0
      %p81 = por %p79, %p80
      %p82 = scmp.ne.s32.totalorder %s74, %s76
      %p83 = scmp.eq.s32.totalorder %s24, 1
      %p84 = por %p82, %p83
      %p85 = scmp.ne.s32.totalorder %s76, %s77
      %p86 = scmp.eq.s32.totalorder %s24, 0
      %p87 = por %p85, %p86
      %p88 = scmp.ne.s32.totalorder %s76, %s77
      %p89 = scmp.eq.s32.totalorder %s25, 1
      %p90 = por %p88, %p89
      %p92 = scmp.ne.s32.totalorder %s77, %s91
      %p93 = scmp.eq.s32.totalorder %s25, 0
      %p94 = por %p92, %p93
      %s96 = sadd.s32 %s95, 1
      %p99 = scmp.eq.s32.totalorder %s19, 1
      %p100 = scmp.ne.s32.totalorder %s95, %s97
      %p101 = scmp.eq.s32.totalorder %s19, 0
      %p102 = por %p100, %p101
      %p103 = scmp.ne.s32.totalorder %s95, %s97
      %p104 = scmp.eq.s32.totalorder %s24, 1
      %p105 = por %p103, %p104
      %p106 = scmp.ne.s32.totalorder %s97, %s98
      %p107 = scmp.eq.s32.totalorder %s24, 0
      %p108 = por %p106, %p107
      %p109 = scmp.ne.s32.totalorder %s97, %s98
      %p110 = scmp.eq.s32.totalorder %s25, 1
      %p111 = por %p109, %p110
      %p113 = scmp.ne.s32.totalorder %s98, %s112
      %p114 = scmp.eq.s32.totalorder %s25, 0
      %p115 = por %p113, %p114
      %s117 = sadd.s32 %s116, 1
      %p120 = scmp.eq.s32.totalorder %s19, 1
      %p121 = scmp.ne.s32.totalorder %s116, %s118
      %p122 = scmp.eq.s32.totalorder %s19, 0
      %p123 = por %p121, %p122
      %p124 = scmp.ne.s32.totalorder %s116, %s118
      %p125 = scmp.eq.s32.totalorder %s24, 1
      %p126 = por %p124, %p125
      %p127 = scmp.ne.s32.totalorder %s118, %s119
      %p128 = scmp.eq.s32.totalorder %s24, 0
      %p129 = por %p127, %p128
      %p130 = scmp.ne.s32.totalorder %s118, %s119
      %p131 = scmp.eq.s32.totalorder %s25, 1
      %p132 = por %p130, %p131
      %p134 = scmp.ne.s32.totalorder %s119, %s133
      %p135 = scmp.eq.s32.totalorder %s25, 0
      %p136 = por %p134, %p135
      %s138 = sadd.s32 %s137, 1
      %p141 = scmp.eq.s32.totalorder %s19, 1
      %p142 = scmp.ne.s32.totalorder %s137, %s139
      %p143 = scmp.eq.s32.totalorder %s19, 0
      %p144 = por %p142, %p143
      %p145 = scmp.ne.s32.totalorder %s137, %s139
      %p146 = scmp.eq.s32.totalorder %s24, 1
      %p147 = por %p145, %p146
      %p148 = scmp.ne.s32.totalorder %s139, %s140
      %p149 = scmp.eq.s32.totalorder %s24, 0
      %p150 = por %p148, %p149
      %p151 = scmp.ne.s32.totalorder %s139, %s140
      %p152 = scmp.eq.s32.totalorder %s25, 1
      %p153 = por %p151, %p152
      %p155 = scmp.ne.s32.totalorder %s140, %s154
      %p156 = scmp.eq.s32.totalorder %s25, 0
      %p157 = por %p155, %p156
      %s159 = sadd.s32 %s158, 1
      %p162 = scmp.eq.s32.totalorder %s19, 1
      %p163 = scmp.ne.s32.totalorder %s158, %s160
      %p164 = scmp.eq.s32.totalorder %s19, 0
      %p165 = por %p163, %p164
      %p166 = scmp.ne.s32.totalorder %s158, %s160
      %p167 = scmp.eq.s32.totalorder %s24, 1
      %p168 = por %p166, %p167
      %p169 = scmp.ne.s32.totalorder %s160, %s161
      %p170 = scmp.eq.s32.totalorder %s24, 0
      %p171 = por %p169, %p170
      %p172 = scmp.ne.s32.totalorder %s160, %s161
      %p173 = scmp.eq.s32.totalorder %s25, 1
      %p174 = por %p172, %p173
      %p176 = scmp.ne.s32.totalorder %s161, %s175
      %p177 = scmp.eq.s32.totalorder %s25, 0
      %p178 = por %p176, %p177
      %s180 = sadd.s32 %s179, 1
      %p183 = scmp.eq.s32.totalorder %s19, 1
      %p184 = scmp.ne.s32.totalorder %s179, %s181
      %p185 = scmp.eq.s32.totalorder %s19, 0
      %p186 = por %p184, %p185
      %p187 = scmp.ne.s32.totalorder %s179, %s181
      %p188 = scmp.eq.s32.totalorder %s24, 1
      %p189 = por %p187, %p188
      %p190 = scmp.ne.s32.totalorder %s181, %s182
      %p191 = scmp.eq.s32.totalorder %s24, 0
      %p192 = por %p190, %p191
      %p193 = scmp.ne.s32.totalorder %s181, %s182
      %p194 = scmp.eq.s32.totalorder %s25, 1
      %p195 = por %p193, %p194
      %p197 = scmp.ne.s32.totalorder %s182, %s196
      %p198 = scmp.eq.s32.totalorder %s25, 0
      %p199 = por %p197, %p198
      %s201 = sadd.s32 %s200, 1
      %p204 = scmp.eq.s32.totalorder %s19, 1
      %p205 = scmp.ne.s32.totalorder %s200, %s202
      %p206 = scmp.eq.s32.totalorder %s19, 0
      %p207 = por %p205, %p206
      %p208 = scmp.ne.s32.totalorder %s200, %s202
      %p209 = scmp.eq.s32.totalorder %s24, 1
      %p210 = por %p208, %p209
      %p211 = scmp.ne.s32.totalorder %s202, %s203
      %p212 = scmp.eq.s32.totalorder %s24, 0
      %p213 = por %p211, %p212
      %p214 = scmp.ne.s32.totalorder %s202, %s203
      %p215 = scmp.eq.s32.totalorder %s25, 1
      %p216 = por %p214, %p215
      %p218 = scmp.ne.s32.totalorder %s203, %s217
      %p219 = scmp.eq.s32.totalorder %s25, 0
      %p220 = por %p218, %p219
      %s222 = sadd.s32 %s221, 1
      %p225 = scmp.eq.s32.totalorder %s19, 1
      %p226 = scmp.ne.s32.totalorder %s221, %s223
      %p227 = scmp.eq.s32.totalorder %s19, 0
      %p228 = por %p226, %p227
      %p229 = scmp.ne.s32.totalorder %s221, %s223
      %p230 = scmp.eq.s32.totalorder %s24, 1
      %p231 = por %p229, %p230
      %p232 = scmp.ne.s32.totalorder %s223, %s224
      %p233 = scmp.eq.s32.totalorder %s24, 0
      %p234 = por %p232, %p233
      %p235 = scmp.ne.s32.totalorder %s223, %s224
      %p236 = scmp.eq.s32.totalorder %s25, 1
      %p237 = por %p235, %p236
      %p239 = scmp.ne.s32.totalorder %s224, %s238
      %p240 = scmp.eq.s32.totalorder %s25, 0
      %p241 = por %p239, %p240
      %s242 = ssub.s32 %s19, %s26
      %p243 = scmp.eq.s32.totalorder %s242, 0
      %s245 = sadd.s32 %s244, 1
      %s246 = scalar_select %p243, %s244, %s245
      %p249 = pneg %p243
      %p250 = scmp.eq.s32.totalorder %s19, 1
      %p251 = por %p249, %p250
      %p252 = scmp.ne.s32.totalorder %s244, %s247
      %p253 = scmp.eq.s32.totalorder %s19, 0
      %p254 = por %p252, %p253
      %p255 = scmp.ne.s32.totalorder %s244, %s247
      %p256 = scmp.eq.s32.totalorder %s24, 1
      %p257 = por %p255, %p256
      %p258 = scmp.ne.s32.totalorder %s247, %s248
      %p259 = scmp.eq.s32.totalorder %s24, 0
      %p260 = por %p258, %p259
      %p261 = scmp.ne.s32.totalorder %s247, %s248
      %p262 = scmp.eq.s32.totalorder %s25, 1
      %p263 = por %p261, %p262
      %p265 = scmp.ne.s32.totalorder %s248, %s264
      %p266 = scmp.eq.s32.totalorder %s25, 0
      %p267 = por %p265, %p266
      %p268 = scmp.le.s32.totalorder 1, %s19
      %p269 = scmp.lt.s32.totalorder %s19, 3
      %p270 = pnand %p268, %p269
      %p271 = pneg %p270
      // Predicated region
      $region9: #{tpu_custom_call.1} parent=5 // pred_check
        _
      $region10: #{tpu_custom_call.1} parent=5 // pred_check_branch
        %273 = sbr.rel (%p270) target = $region12
      $region11: #{tpu_custom_call.1} parent=5 // pred_region
        %s274 = ssub.s32 %s19, 1
        // Predicated region
        $region13: #{tpu_custom_call.1} parent=11 // pred_check
          %p275 = pneg %p66
        $region14: #{tpu_custom_call.1} parent=11 // pred_check_branch
          %277 = sbr.rel (%p275) target = $region16
        $region15: #{tpu_custom_call.1} parent=11 // pred_region
          _
        $region16: #{tpu_custom_call.1} parent=11 // pred_fallthru
          _
        // Predicated region
        $region17: #{tpu_custom_call.1} parent=11 // pred_check
          %p278 = pneg %p87
        $region18: #{tpu_custom_call.1} parent=11 // pred_check_branch
          %280 = sbr.rel (%p278) target = $region20
        $region19: #{tpu_custom_call.1} parent=11 // pred_region
          _
        $region20: #{tpu_custom_call.1} parent=11 // pred_fallthru
          _
        // Predicated region
        $region21: #{tpu_custom_call.1} parent=11 // pred_check
          %p281 = pneg %p108
        $region22: #{tpu_custom_call.1} parent=11 // pred_check_branch
          %283 = sbr.rel (%p281) target = $region24
        $region23: #{tpu_custom_call.1} parent=11 // pred_region
          _
        $region24: #{tpu_custom_call.1} parent=11 // pred_fallthru
          _
        // Predicated region
        $region25: #{tpu_custom_call.1} parent=11 // pred_check
          %p284 = pneg %p129
        $region26: #{tpu_custom_call.1} parent=11 // pred_check_branch
          %286 = sbr.rel (%p284) target = $region28
        $region27: #{tpu_custom_call.1} parent=11 // pred_region
          _
        $region28: #{tpu_custom_call.1} parent=11 // pred_fallthru
          _
        // Predicated region
        $region29: #{tpu_custom_call.1} parent=11 // pred_check
          %p287 = pneg %p150
        $region30: #{tpu_custom_call.1} parent=11 // pred_check_branch
          %289 = sbr.rel (%p287) target = $region32
        $region31: #{tpu_custom_call.1} parent=11 // pred_region
          _
        $region32: #{tpu_custom_call.1} parent=11 // pred_fallthru
          _
        // Predicated region
        $region33: #{tpu_custom_call.1} parent=11 // pred_check
          %p290 = pneg %p171
        $region34: #{tpu_custom_call.1} parent=11 // pred_check_branch
          %292 = sbr.rel (%p290) target = $region36
        $region35: #{tpu_custom_call.1} parent=11 // pred_region
          _
        $region36: #{tpu_custom_call.1} parent=11 // pred_fallthru
          _
        // Predicated region
        $region37: #{tpu_custom_call.1} parent=11 // pred_check
          %p293 = pneg %p192
        $region38: #{tpu_custom_call.1} parent=11 // pred_check_branch
          %295 = sbr.rel (%p293) target = $region40
        $region39: #{tpu_custom_call.1} parent=11 // pred_region
          _
        $region40: #{tpu_custom_call.1} parent=11 // pred_fallthru
          _
        // Predicated region
        $region41: #{tpu_custom_call.1} parent=11 // pred_check
          %p296 = pneg %p213
        $region42: #{tpu_custom_call.1} parent=11 // pred_check_branch
          %298 = sbr.rel (%p296) target = $region44
        $region43: #{tpu_custom_call.1} parent=11 // pred_region
          _
        $region44: #{tpu_custom_call.1} parent=11 // pred_fallthru
          _
        // Predicated region
        $region45: #{tpu_custom_call.1} parent=11 // pred_check
          %p299 = pneg %p234
        $region46: #{tpu_custom_call.1} parent=11 // pred_check_branch
          %301 = sbr.rel (%p299) target = $region48
        $region47: #{tpu_custom_call.1} parent=11 // pred_region
          _
        $region48: #{tpu_custom_call.1} parent=11 // pred_fallthru
          _
      $region12: #{tpu_custom_call.1} parent=5 // pred_fallthru
        _
      %p302 = scmp.lt.s32.totalorder %s19, 2
      // Predicated region
      $region49: #{tpu_custom_call.1} parent=5 // pred_check
        %p303 = pneg %p302
      $region50: #{tpu_custom_call.1} parent=5 // pred_check_branch
        %305 = sbr.rel (%p303) target = $region52
      $region51: #{tpu_custom_call.1} parent=5 // pred_region
        // Predicated region
        $region53: #{tpu_custom_call.1} parent=51 // pred_check
          %p306 = pneg %p39
        $region54: #{tpu_custom_call.1} parent=51 // pred_check_branch
          %308 = sbr.rel (%p306) target = $region56
        $region55: #{tpu_custom_call.1} parent=51 // pred_region
          %p309 = scmp.lt.s32.totalorder %s19, 1
          %s310 = scalar_select %p309, %s19, 1
          %s311 = smul.addr %s310, 2
          %s312 = smul.addr %s311, 8
          %s313 = scalar_lea.vmem %s0, %s312
        $region56: #{tpu_custom_call.1} parent=51 // pred_fallthru
          _
      $region52: #{tpu_custom_call.1} parent=5 // pred_fallthru
        _
      %p314 = scmp.le.s32.totalorder 1, %s19
      %p315 = scmp.lt.s32.totalorder %s19, 3
      %p316 = pnand %p314, %p315
      %p317 = pneg %p316
      // Predicated region
      $region57: #{tpu_custom_call.1} parent=5 // pred_check
        _
      $region58: #{tpu_custom_call.1} parent=5 // pred_check_branch
        %319 = sbr.rel (%p316) target = $region60
      $region59: #{tpu_custom_call.1} parent=5 // pred_region
        %s320 = ssub.s32 %s19, 1
        %p321 = scmp.lt.s32.totalorder %s24, 1
        %s322 = scalar_select %p321, %s24, 1
        %s323 = smul.addr %s322, 2
        %s324 = smul.addr %s323, 8
        %s325 = scalar_lea.vmem %s0, %s324
        %p326 = pneg %p45
        %p327 = pneg %p42
        %p328 = pneg %p66
        %p329 = pneg %p63
        %p330 = pneg %p87
        %p331 = pneg %p84
        %p332 = pneg %p108
        %p333 = pneg %p105
        %p334 = pneg %p129
        %p335 = pneg %p126
        %p336 = pneg %p150
        %p337 = pneg %p147
        %p338 = pneg %p171
        %p339 = pneg %p168
        %p340 = pneg %p192
        %p341 = pneg %p189
        %p342 = pneg %p213
        %p343 = pneg %p210
        %p344 = pneg %p234
        %p345 = pneg %p231
        %p346 = pneg %p260
        %p347 = pneg %p257
        %s348 = sand.u32 %s247, 1
        %s349 = scalar_lea.sflag [#allocation3], %s348
        %s350 = sand.u32 %s247, 1
        %s351 = smul.addr %s350, 16
        %s352 = scalar_lea.vmem [#allocation2], %s351
        %p353 = scmp.lt.s32.totalorder %s24, 1
        %s354 = scalar_select %p353, %s24, 1
        %s355 = smul.addr %s354, 2
        %s356 = smul.addr %s355, 8
        %s357 = scalar_lea.vmem %s0, %s356
        %v358 = vld [vmem:[%s357] sm:$0xff]
        %v359 = vld [vmem:[%s357 + $0x8] sm:$0xff]
        %v360 = vld [vmem:[%s1] sm:$0xff]
        %v361 = vld [vmem:[%s1 + $0x8] sm:$0xff]
        %v362 = vld [vmem:[%s1 + $0x10] sm:$0xff]
        %v363 = vld [vmem:[%s1 + $0x18] sm:$0xff]
        %v364 = vld [vmem:[%s1 + $0x20] sm:$0xff]
        %v365 = vld [vmem:[%s1 + $0x28] sm:$0xff]
        %v366 = vld [vmem:[%s1 + $0x30] sm:$0xff]
        %v367 = vld [vmem:[%s1 + $0x38] sm:$0xff]
        %v368 = vld [vmem:[%s1 + $0x40] sm:$0xff]
        %v369 = vld [vmem:[%s1 + $0x48] sm:$0xff]
        %v370 = vld [vmem:[%s1 + $0x50] sm:$0xff]
        %v371 = vld [vmem:[%s1 + $0x58] sm:$0xff]
        %v372 = vld [vmem:[%s1 + $0x60] sm:$0xff]
        %v373 = vld [vmem:[%s1 + $0x68] sm:$0xff]
        %v374 = vld [vmem:[%s1 + $0x70] sm:$0xff]
        %v375 = vld [vmem:[%s1 + $0x78] sm:$0xff]
        %v376 = vld [vmem:[%s2] sm:$0x3]
        %v378 = vlaneseq
        %v379 = vshrl.u32 %v378, 7
        %v380 = vsub.s32 0, %v379
        %v381 = vrot.slane %v376, %v380
        %v382 = vlaneseq
        %v383 = vshrl.u32 %v382, 7
        %v384 = vsub.s32 1, %v383
        %v385 = vrot.slane %v376, %v384
        %vm388 = vcmask 523264
        %v390 = vsel %vm388, %v358, 0
        %v393 = vsel %vm388, %v359, 0
        %395 = vmatprep.subr.mxu0 %v361
        %396 = vmatpush1.msra.mxu0 %v360
        %397 = vmatprep.subr.mxu0 %v363
        %398 = vmatpush1.msra.mxu0 %v362
        %399 = vmatprep.subr.mxu0 %v365
        %400 = vmatpush1.msra.mxu0 %v364
        %401 = vmatprep.subr.mxu0 %v367
        %402 = vmatpush1.msra.mxu0 %v366
        %403 = vmatprep.subr.mxu0 %v369
        %404 = vmatpush1.msra.mxu0 %v368
        %405 = vmatprep.subr.mxu0 %v371
        %406 = vmatpush1.msra.mxu0 %v370
        %407 = vmatprep.subr.mxu0 %v373
        %408 = vmatpush1.msra.mxu0 %v372
        %409 = vmatprep.subr.mxu0 %v375
        %410 = vmatpush1.msra.mxu0 %v374
        %411 = vmatprep.subr.mxu0 0.0
        %412 = vmatpush1.msra.mxu0 0.0
        %413 = vmatprep.subr.mxu0 0.0
        %414 = vmatpush1.msra.mxu0 0.0
        %415 = vmatprep.subr.mxu0 0.0
        %416 = vmatpush1.msra.mxu0 0.0
        %417 = vmatprep.subr.mxu0 0.0
        %418 = vmatpush1.msra.mxu0 0.0
        %419 = vmatprep.subr.mxu0 0.0
        %420 = vmatpush1.msra.mxu0 0.0
        %421 = vmatprep.subr.mxu0 0.0
        %422 = vmatpush1.msra.mxu0 0.0
        %423 = vmatprep.subr.mxu0 0.0
        %424 = vmatpush1.msra.mxu0 0.0
        %425 = vmatprep.subr.mxu0 0.0
        %426 = vmatpush1.msra.mxu0 0.0
        %427 = vmatprep.subr.mxu0 0.0
        %428 = vmatpush1.msra.mxu0 0.0
        %429 = vmatprep.subr.mxu0 0.0
        %430 = vmatpush1.msra.mxu0 0.0
        %431 = vmatprep.subr.mxu0 0.0
        %432 = vmatpush1.msra.mxu0 0.0
        %433 = vmatprep.subr.mxu0 0.0
        %434 = vmatpush1.msra.mxu0 0.0
        %435 = vmatprep.subr.mxu0 0.0
        %436 = vmatpush1.msra.mxu0 0.0
        %437 = vmatprep.subr.mxu0 0.0
        %438 = vmatpush1.msra.mxu0 0.0
        %439 = vmatprep.subr.mxu0 0.0
        %440 = vmatpush1.msra.mxu0 0.0
        %441 = vmatprep.subr.mxu0 0.0
        %442 = vmatpush1.msra.mxu0 0.0
        %443 = vmatprep.subr.mxu0 0.0
        %444 = vmatpush1.msra.mxu0 0.0
        %445 = vmatprep.subr.mxu0 0.0
        %446 = vmatpush1.msra.mxu0 0.0
        %447 = vmatprep.subr.mxu0 0.0
        %448 = vmatpush1.msra.mxu0 0.0
        %449 = vmatprep.subr.mxu0 0.0
        %450 = vmatpush1.msra.mxu0 0.0
        %451 = vmatprep.subr.mxu0 0.0
        %452 = vmatpush1.msra.mxu0 0.0
        %453 = vmatprep.subr.mxu0 0.0
        %454 = vmatpush1.msra.mxu0 0.0
        %455 = vmatprep.subr.mxu0 0.0
        %456 = vmatpush1.msra.mxu0 0.0
        %457 = vmatprep.subr.mxu0 0.0
        %458 = vmatpush1.msra.mxu0 0.0
        %459 = vmatprep.mubr.f32.mxu0 0.0
        %460 = vmatmul.mubr.f32.gmra.mrb[0].mxu0 %v390
        %v461 = vpop.f32.mrb[0].mxu0
        %v462 = vadd.f32 %v381, %v461
        %v463 = vpop.f32.mrb[0].mxu0
        %v464 = vadd.f32 %v385, %v463
        %465 = vmatprep.mubr.f32.mxu0 0.0
        %466 = vmatmul.mubr.f32.gmra.mrb[0].mxu0 %v393
        %v467 = vpop.f32.mrb[0].mxu0
        %v468 = vadd.f32 %v381, %v467
        %v469 = vpop.f32.mrb[0].mxu0
        %v470 = vadd.f32 %v385, %v469
        %471 = vdwg.mxu0
        %vm472 = vcmp.ge.f32.partialorder %v462, 0.0
        %vm473 = vcmp.ge.f32.partialorder %v464, 0.0
        %vm474 = vcmp.ge.f32.partialorder %v468, 0.0
        %vm475 = vcmp.ge.f32.partialorder %v470, 0.0
        %v476 = vld [vmem:[%s3] sm:$0x3]
        %v478 = vlaneseq
        %v479 = vshrl.u32 %v478, 7
        %v480 = vsub.s32 0, %v479
        %v481 = vrot.slane %v476, %v480
        %v482 = vlaneseq
        %v483 = vshrl.u32 %v482, 7
        %v484 = vsub.s32 1, %v483
        %v485 = vrot.slane %v476, %v484
        %v488 = vmul.f32 %v481, %v462
        %v489 = vmul.f32 %v485, %v464
        %v490 = vmul.f32 %v481, %v468
        %v491 = vmul.f32 %v485, %v470
        %v492 = vsel %vm472, %v462, %v488
        %v493 = vsel %vm473, %v464, %v489
        %v494 = vsel %vm474, %v468, %v490
        %v495 = vsel %vm475, %v470, %v491
        %500 = vrot.lane.b32.xlu0 %v492, 16
        %v501 = vpop.permute.xlu0 %500
        %502 = vrot.lane.b32.xlu0 %v493, 16
        %v503 = vpop.permute.xlu0 %502
        %504 = vrot.lane.b32.xlu0 %v494, 16
        %v505 = vpop.permute.xlu0 %504
        %506 = vrot.lane.b32.xlu0 %v495, 16
        %v507 = vpop.permute.xlu0 %506
        %vm508 = vcmask 130048
        %v509 = vsel %vm508, %v501, %v503
        %v510 = vsel %vm508, %v505, %v507
        %v515 = vsel %vm508, 0.0, %v501
        %v516 = vsel %vm508, 0.0, %v505
        %v517 = vsel %vm508, %v503, 0.0
        %v518 = vsel %vm508, %v507, 0.0
        %vm523 = vcmask 1040384
        %v524 = vrot.slane %v515, 7
        %v525 = vrot.slane %v509, 7
        %v526 = vrot.slane %v517, 7
        %v527 = vrot.slane %v516, 7
        %v528 = vsel %vm523, %v524, %v527
        %v529 = vrot.slane %v510, 7
        %v530 = vsel %vm523, %v525, %v529
        %v531 = vrot.slane %v518, 7
        %v532 = vsel %vm523, %v526, %v531
        %v542 = vsel %vm523, 0.0, %v524
        %v543 = vsel %vm523, 0.0, %v525
        %v544 = vsel %vm523, 0.0, %v526
        %v545 = vsel %vm523, %v527, 0.0
        %v546 = vsel %vm523, %v529, 0.0
        %v547 = vsel %vm523, %v531, 0.0
        %v548 = vld [vmem:[%s4] sm:$0x77]
        %v549 = vld [vmem:[%s4 + $0x8] sm:$0x77]
        %v550 = vld [vmem:[%s4 + $0x10] sm:$0x77]
        %v552 = vlaneseq
        %v553 = vshrl.u32 %v552, 7
        %v554 = vsub.s32 0, %v553
        %v555 = vrot.slane %v548, %v554
        %v556 = vlaneseq
        %v557 = vshrl.u32 %v556, 7
        %v558 = vsub.s32 4, %v557
        %v559 = vrot.slane %v548, %v558
        %v562 = vlaneseq
        %v563 = vshrl.u32 %v562, 7
        %v564 = vsub.s32 0, %v563
        %v565 = vrot.slane %v555, %v564
        %v566 = vlaneseq
        %v567 = vshrl.u32 %v566, 7
        %v568 = vsub.s32 0, %v567
        %v569 = vrot.slane %v559, %v568
        %v570 = vmul.f32 %v542, %v565
        %v571 = vmul.f32 %v543, %v569
        %v572 = vmul.f32 %v528, %v565
        %v573 = vmul.f32 %v530, %v569
        %v574 = vadd.f32 %v570, 0.0
        %v575 = vadd.f32 %v571, 0.0
        %v576 = vadd.f32 %v572, 0.0
        %v577 = vadd.f32 %v573, 0.0
        %v578 = vlaneseq
        %v579 = vshrl.u32 %v578, 7
        %v580 = vsub.s32 1, %v579
        %v581 = vrot.slane %v548, %v580
        %v582 = vlaneseq
        %v583 = vshrl.u32 %v582, 7
        %v584 = vsub.s32 5, %v583
        %v585 = vrot.slane %v548, %v584
        %v588 = vlaneseq
        %v589 = vshrl.u32 %v588, 7
        %v590 = vsub.s32 1, %v589
        %v591 = vrot.slane %v581, %v590
        %v592 = vlaneseq
        %v593 = vshrl.u32 %v592, 7
        %v594 = vsub.s32 1, %v593
        %v595 = vrot.slane %v585, %v594
        %598 = vrot.lane.b32.xlu0 %v591, 16
        %v599 = vpop.permute.xlu0 %598
        %600 = vrot.lane.b32.xlu0 %v595, 16
        %v601 = vpop.permute.xlu0 %600
        %v602 = vsel %vm508, %v599, %v601
        %v606 = vmul.f32 %v542, %v599
        %v607 = vmul.f32 %v543, %v602
        %v608 = vmul.f32 %v544, %v601
        %v609 = vmul.f32 %v528, %v599
        %v610 = vmul.f32 %v530, %v602
        %v611 = vmul.f32 %v532, %v601
        %618 = vrot.lane.b32.xlu0 %v606, 112
        %v619 = vpop.permute.xlu0 %618
        %620 = vrot.lane.b32.xlu0 %v607, 112
        %v621 = vpop.permute.xlu0 %620
        %622 = vrot.lane.b32.xlu0 %v608, 112
        %v623 = vpop.permute.xlu0 %622
        %624 = vrot.lane.b32.xlu0 %v609, 112
        %v625 = vpop.permute.xlu0 %624
        %626 = vrot.lane.b32.xlu0 %v610, 112
        %v627 = vpop.permute.xlu0 %626
        %628 = vrot.lane.b32.xlu0 %v611, 112
        %v629 = vpop.permute.xlu0 %628
        %vm630 = vcmask 916480
        %v631 = vsel %vm630, %v619, %v621
        %v632 = vsel %vm630, %v621, %v623
        %v633 = vsel %vm630, %v625, %v627
        %v634 = vsel %vm630, %v627, %v629
        %v639 = vadd.f32 %v574, %v631
        %v640 = vadd.f32 %v575, %v632
        %v641 = vadd.f32 %v576, %v633
        %v642 = vadd.f32 %v577, %v634
        %v643 = vlaneseq
        %v644 = vshrl.u32 %v643, 7
        %v645 = vsub.s32 2, %v644
        %v646 = vrot.slane %v548, %v645
        %v647 = vlaneseq
        %v648 = vshrl.u32 %v647, 7
        %v649 = vsub.s32 6, %v648
        %v650 = vrot.slane %v548, %v649
        %v653 = vlaneseq
        %v654 = vshrl.u32 %v653, 7
        %v655 = vsub.s32 2, %v654
        %v656 = vrot.slane %v646, %v655
        %v657 = vlaneseq
        %v658 = vshrl.u32 %v657, 7
        %v659 = vsub.s32 2, %v658
        %v660 = vrot.slane %v650, %v659
        %663 = vrot.lane.b32.xlu0 %v656, 32
        %v664 = vpop.permute.xlu0 %663
        %665 = vrot.lane.b32.xlu0 %v660, 32
        %v666 = vpop.permute.xlu0 %665
        %vm667 = vcmask 261120
        %v668 = vsel %vm667, %v664, %v666
        %v672 = vmul.f32 %v542, %v664
        %v673 = vmul.f32 %v543, %v668
        %v674 = vmul.f32 %v544, %v666
        %v675 = vmul.f32 %v528, %v664
        %v676 = vmul.f32 %v530, %v668
        %v677 = vmul.f32 %v532, %v666
        %684 = vrot.lane.b32.xlu0 %v672, 96
        %v685 = vpop.permute.xlu0 %684
        %686 = vrot.lane.b32.xlu0 %v673, 96
        %v687 = vpop.permute.xlu0 %686
        %688 = vrot.lane.b32.xlu0 %v674, 96
        %v689 = vpop.permute.xlu0 %688
        %690 = vrot.lane.b32.xlu0 %v675, 96
        %v691 = vpop.permute.xlu0 %690
        %692 = vrot.lane.b32.xlu0 %v676, 96
        %v693 = vpop.permute.xlu0 %692
        %694 = vrot.lane.b32.xlu0 %v677, 96
        %v695 = vpop.permute.xlu0 %694
        %vm696 = vcmask 785408
        %v697 = vsel %vm696, %v685, %v687
        %v698 = vsel %vm696, %v687, %v689
        %v699 = vsel %vm696, %v691, %v693
        %v700 = vsel %vm696, %v693, %v695
        %v705 = vadd.f32 %v639, %v697
        %v706 = vadd.f32 %v640, %v698
        %v707 = vadd.f32 %v641, %v699
        %v708 = vadd.f32 %v642, %v700
        %v710 = vlaneseq
        %v711 = vshrl.u32 %v710, 7
        %v712 = vsub.s32 0, %v711
        %v713 = vrot.slane %v549, %v712
        %v714 = vlaneseq
        %v715 = vshrl.u32 %v714, 7
        %v716 = vsub.s32 4, %v715
        %v717 = vrot.slane %v549, %v716
        %v720 = vlaneseq
        %v721 = vshrl.u32 %v720, 7
        %v722 = vsub.s32 0, %v721
        %v723 = vrot.slane %v713, %v722
        %v724 = vlaneseq
        %v725 = vshrl.u32 %v724, 7
        %v726 = vsub.s32 0, %v725
        %v727 = vrot.slane %v717, %v726
        %v728 = vmul.f32 %v542, %v723
        %v729 = vmul.f32 %v543, %v727
        %v730 = vmul.f32 %v528, %v723
        %v731 = vmul.f32 %v530, %v727
        %v732 = vmul.f32 %v545, %v723
        %v733 = vmul.f32 %v546, %v727
        %vm740 = vcmask 1046528
        %v741 = vrot.slane %v728, 1
        %v742 = vrot.slane %v730, 1
        %v743 = vsel %vm740, %v741, %v742
        %v744 = vrot.slane %v729, 1
        %v745 = vrot.slane %v731, 1
        %v746 = vsel %vm740, %v744, %v745
        %v747 = vrot.slane %v732, 1
        %v748 = vsel %vm740, %v742, %v747
        %v749 = vrot.slane %v733, 1
        %v750 = vsel %vm740, %v745, %v749
        %v755 = vadd.f32 %v705, %v743
        %v756 = vadd.f32 %v706, %v746
        %v757 = vadd.f32 %v707, %v748
        %v758 = vadd.f32 %v708, %v750
        %v759 = vlaneseq
        %v760 = vshrl.u32 %v759, 7
        %v761 = vsub.s32 1, %v760
        %v762 = vrot.slane %v549, %v761
        %v763 = vlaneseq
        %v764 = vshrl.u32 %v763, 7
        %v765 = vsub.s32 5, %v764
        %v766 = vrot.slane %v549, %v765
        %v769 = vlaneseq
        %v770 = vshrl.u32 %v769, 7
        %v771 = vsub.s32 1, %v770
        %v772 = vrot.slane %v762, %v771
        %v773 = vlaneseq
        %v774 = vshrl.u32 %v773, 7
        %v775 = vsub.s32 1, %v774
        %v776 = vrot.slane %v766, %v775
        %779 = vrot.lane.b32.xlu0 %v772, 16
        %v780 = vpop.permute.xlu0 %779
        %781 = vrot.lane.b32.xlu0 %v776, 16
        %v782 = vpop.permute.xlu0 %781
        %v783 = vsel %vm508, %v780, %v782
        %v787 = vmul.f32 %v542, %v780
        %v788 = vmul.f32 %v543, %v783
        %v789 = vmul.f32 %v544, %v782
        %v790 = vmul.f32 %v528, %v780
        %v791 = vmul.f32 %v530, %v783
        %v792 = vmul.f32 %v532, %v782
        %v793 = vmul.f32 %v545, %v780
        %v794 = vmul.f32 %v546, %v783
        %v795 = vmul.f32 %v547, %v782
        %v805 = vrot.slane %v787, 1
        %v806 = vrot.slane %v790, 1
        %v807 = vsel %vm740, %v805, %v806
        %v808 = vrot.slane %v788, 1
        %v809 = vrot.slane %v791, 1
        %v810 = vsel %vm740, %v808, %v809
        %v811 = vrot.slane %v789, 1
        %v812 = vrot.slane %v792, 1
        %v813 = vsel %vm740, %v811, %v812
        %v814 = vrot.slane %v793, 1
        %v815 = vsel %vm740, %v806, %v814
        %v816 = vrot.slane %v794, 1
        %v817 = vsel %vm740, %v809, %v816
        %v818 = vrot.slane %v795, 1
        %v819 = vsel %vm740, %v812, %v818
        %820 = vrot.lane.b32.xlu0 %v807, 112
        %v821 = vpop.permute.xlu0 %820
        %822 = vrot.lane.b32.xlu0 %v810, 112
        %v823 = vpop.permute.xlu0 %822
        %824 = vrot.lane.b32.xlu0 %v813, 112
        %v825 = vpop.permute.xlu0 %824
        %826 = vrot.lane.b32.xlu0 %v815, 112
        %v827 = vpop.permute.xlu0 %826
        %828 = vrot.lane.b32.xlu0 %v817, 112
        %v829 = vpop.permute.xlu0 %828
        %830 = vrot.lane.b32.xlu0 %v819, 112
        %v831 = vpop.permute.xlu0 %830
        %v832 = vsel %vm630, %v821, %v823
        %v833 = vsel %vm630, %v823, %v825
        %v834 = vsel %vm630, %v827, %v829
        %v835 = vsel %vm630, %v829, %v831
        %v840 = vadd.f32 %v755, %v832
        %v841 = vadd.f32 %v756, %v833
        %v842 = vadd.f32 %v757, %v834
        %v843 = vadd.f32 %v758, %v835
        %v844 = vlaneseq
        %v845 = vshrl.u32 %v844, 7
        %v846 = vsub.s32 2, %v845
        %v847 = vrot.slane %v549, %v846
        %v848 = vlaneseq
        %v849 = vshrl.u32 %v848, 7
        %v850 = vsub.s32 6, %v849
        %v851 = vrot.slane %v549, %v850
        %v854 = vlaneseq
        %v855 = vshrl.u32 %v854, 7
        %v856 = vsub.s32 2, %v855
        %v857 = vrot.slane %v847, %v856
        %v858 = vlaneseq
        %v859 = vshrl.u32 %v858, 7
        %v860 = vsub.s32 2, %v859
        %v861 = vrot.slane %v851, %v860
        %864 = vrot.lane.b32.xlu0 %v857, 32
        %v865 = vpop.permute.xlu0 %864
        %866 = vrot.lane.b32.xlu0 %v861, 32
        %v867 = vpop.permute.xlu0 %866
        %v868 = vsel %vm667, %v865, %v867
        %v872 = vmul.f32 %v542, %v865
        %v873 = vmul.f32 %v543, %v868
        %v874 = vmul.f32 %v544, %v867
        %v875 = vmul.f32 %v528, %v865
        %v876 = vmul.f32 %v530, %v868
        %v877 = vmul.f32 %v532, %v867
        %v878 = vmul.f32 %v545, %v865
        %v879 = vmul.f32 %v546, %v868
        %v880 = vmul.f32 %v547, %v867
        %v890 = vrot.slane %v872, 1
        %v891 = vrot.slane %v875, 1
        %v892 = vsel %vm740, %v890, %v891
        %v893 = vrot.slane %v873, 1
        %v894 = vrot.slane %v876, 1
        %v895 = vsel %vm740, %v893, %v894
        %v896 = vrot.slane %v874, 1
        %v897 = vrot.slane %v877, 1
        %v898 = vsel %vm740, %v896, %v897
        %v899 = vrot.slane %v878, 1
        %v900 = vsel %vm740, %v891, %v899
        %v901 = vrot.slane %v879, 1
        %v902 = vsel %vm740, %v894, %v901
        %v903 = vrot.slane %v880, 1
        %v904 = vsel %vm740, %v897, %v903
        %905 = vrot.lane.b32.xlu0 %v892, 96
        %v906 = vpop.permute.xlu0 %905
        %907 = vrot.lane.b32.xlu0 %v895, 96
        %v908 = vpop.permute.xlu0 %907
        %909 = vrot.lane.b32.xlu0 %v898, 96
        %v910 = vpop.permute.xlu0 %909
        %911 = vrot.lane.b32.xlu0 %v900, 96
        %v912 = vpop.permute.xlu0 %911
        %913 = vrot.lane.b32.xlu0 %v902, 96
        %v914 = vpop.permute.xlu0 %913
        %915 = vrot.lane.b32.xlu0 %v904, 96
        %v916 = vpop.permute.xlu0 %915
        %v917 = vsel %vm696, %v906, %v908
        %v918 = vsel %vm696, %v908, %v910
        %v919 = vsel %vm696, %v912, %v914
        %v920 = vsel %vm696, %v914, %v916
        %v925 = vadd.f32 %v840, %v917
        %v926 = vadd.f32 %v841, %v918
        %v927 = vadd.f32 %v842, %v919
        %v928 = vadd.f32 %v843, %v920
        %v930 = vlaneseq
        %v931 = vshrl.u32 %v930, 7
        %v932 = vsub.s32 0, %v931
        %v933 = vrot.slane %v550, %v932
        %v934 = vlaneseq
        %v935 = vshrl.u32 %v934, 7
        %v936 = vsub.s32 4, %v935
        %v937 = vrot.slane %v550, %v936
        %v940 = vlaneseq
        %v941 = vshrl.u32 %v940, 7
        %v942 = vsub.s32 0, %v941
        %v943 = vrot.slane %v933, %v942
        %v944 = vlaneseq
        %v945 = vshrl.u32 %v944, 7
        %v946 = vsub.s32 0, %v945
        %v947 = vrot.slane %v937, %v946
        %v948 = vmul.f32 %v542, %v943
        %v949 = vmul.f32 %v543, %v947
        %v950 = vmul.f32 %v528, %v943
        %v951 = vmul.f32 %v530, %v947
        %v952 = vmul.f32 %v545, %v943
        %v953 = vmul.f32 %v546, %v947
        %vm960 = vcmask 1045504
        %v961 = vrot.slane %v948, 2
        %v962 = vrot.slane %v950, 2
        %v963 = vsel %vm960, %v961, %v962
        %v964 = vrot.slane %v949, 2
        %v965 = vrot.slane %v951, 2
        %v966 = vsel %vm960, %v964, %v965
        %v967 = vrot.slane %v952, 2
        %v968 = vsel %vm960, %v962, %v967
        %v969 = vrot.slane %v953, 2
        %v970 = vsel %vm960, %v965, %v969
        %v975 = vadd.f32 %v925, %v963
        %v976 = vadd.f32 %v926, %v966
        %v977 = vadd.f32 %v927, %v968
        %v978 = vadd.f32 %v928, %v970
        %v979 = vlaneseq
        %v980 = vshrl.u32 %v979, 7
        %v981 = vsub.s32 1, %v980
        %v982 = vrot.slane %v550, %v981
        %v983 = vlaneseq
        %v984 = vshrl.u32 %v983, 7
        %v985 = vsub.s32 5, %v984
        %v986 = vrot.slane %v550, %v985
        %v989 = vlaneseq
        %v990 = vshrl.u32 %v989, 7
        %v991 = vsub.s32 1, %v990
        %v992 = vrot.slane %v982, %v991
        %v993 = vlaneseq
        %v994 = vshrl.u32 %v993, 7
        %v995 = vsub.s32 1, %v994
        %v996 = vrot.slane %v986, %v995
        %999 = vrot.lane.b32.xlu0 %v992, 16
        %v1000 = vpop.permute.xlu0 %999
        %1001 = vrot.lane.b32.xlu0 %v996, 16
        %v1002 = vpop.permute.xlu0 %1001
        %v1003 = vsel %vm508, %v1000, %v1002
        %v1007 = vmul.f32 %v542, %v1000
        %v1008 = vmul.f32 %v543, %v1003
        %v1009 = vmul.f32 %v544, %v1002
        %v1010 = vmul.f32 %v528, %v1000
        %v1011 = vmul.f32 %v530, %v1003
        %v1012 = vmul.f32 %v532, %v1002
        %v1013 = vmul.f32 %v545, %v1000
        %v1014 = vmul.f32 %v546, %v1003
        %v1015 = vmul.f32 %v547, %v1002
        %v1025 = vrot.slane %v1007, 2
        %v1026 = vrot.slane %v1010, 2
        %v1027 = vsel %vm960, %v1025, %v1026
        %v1028 = vrot.slane %v1008, 2
        %v1029 = vrot.slane %v1011, 2
        %v1030 = vsel %vm960, %v1028, %v1029
        %v1031 = vrot.slane %v1009, 2
        %v1032 = vrot.slane %v1012, 2
        %v1033 = vsel %vm960, %v1031, %v1032
        %v1034 = vrot.slane %v1013, 2
        %v1035 = vsel %vm960, %v1026, %v1034
        %v1036 = vrot.slane %v1014, 2
        %v1037 = vsel %vm960, %v1029, %v1036
        %v1038 = vrot.slane %v1015, 2
        %v1039 = vsel %vm960, %v1032, %v1038
        %1040 = vrot.lane.b32.xlu0 %v1027, 112
        %v1041 = vpop.permute.xlu0 %1040
        %1042 = vrot.lane.b32.xlu0 %v1030, 112
        %v1043 = vpop.permute.xlu0 %1042
        %1044 = vrot.lane.b32.xlu0 %v1033, 112
        %v1045 = vpop.permute.xlu0 %1044
        %1046 = vrot.lane.b32.xlu0 %v1035, 112
        %v1047 = vpop.permute.xlu0 %1046
        %1048 = vrot.lane.b32.xlu0 %v1037, 112
        %v1049 = vpop.permute.xlu0 %1048
        %1050 = vrot.lane.b32.xlu0 %v1039, 112
        %v1051 = vpop.permute.xlu0 %1050
        %v1052 = vsel %vm630, %v1041, %v1043
        %v1053 = vsel %vm630, %v1043, %v1045
        %v1054 = vsel %vm630, %v1047, %v1049
        %v1055 = vsel %vm630, %v1049, %v1051
        %v1060 = vadd.f32 %v975, %v1052
        %v1061 = vadd.f32 %v976, %v1053
        %v1062 = vadd.f32 %v977, %v1054
        %v1063 = vadd.f32 %v978, %v1055
        %v1064 = vlaneseq
        %v1065 = vshrl.u32 %v1064, 7
        %v1066 = vsub.s32 2, %v1065
        %v1067 = vrot.slane %v550, %v1066
        %v1068 = vlaneseq
        %v1069 = vshrl.u32 %v1068, 7
        %v1070 = vsub.s32 6, %v1069
        %v1071 = vrot.slane %v550, %v1070
        %v1074 = vlaneseq
        %v1075 = vshrl.u32 %v1074, 7
        %v1076 = vsub.s32 2, %v1075
        %v1077 = vrot.slane %v1067, %v1076
        %v1078 = vlaneseq
        %v1079 = vshrl.u32 %v1078, 7
        %v1080 = vsub.s32 2, %v1079
        %v1081 = vrot.slane %v1071, %v1080
        %1084 = vrot.lane.b32.xlu0 %v1077, 32
        %v1085 = vpop.permute.xlu0 %1084
        %1086 = vrot.lane.b32.xlu0 %v1081, 32
        %v1087 = vpop.permute.xlu0 %1086
        %v1088 = vsel %vm667, %v1085, %v1087
        %v1092 = vmul.f32 %v542, %v1085
        %v1093 = vmul.f32 %v543, %v1088
        %v1094 = vmul.f32 %v544, %v1087
        %v1095 = vmul.f32 %v528, %v1085
        %v1096 = vmul.f32 %v530, %v1088
        %v1097 = vmul.f32 %v532, %v1087
        %v1098 = vmul.f32 %v545, %v1085
        %v1099 = vmul.f32 %v546, %v1088
        %v1100 = vmul.f32 %v547, %v1087
        %v1110 = vrot.slane %v1092, 2
        %v1111 = vrot.slane %v1095, 2
        %v1112 = vsel %vm960, %v1110, %v1111
        %v1113 = vrot.slane %v1093, 2
        %v1114 = vrot.slane %v1096, 2
        %v1115 = vsel %vm960, %v1113, %v1114
        %v1116 = vrot.slane %v1094, 2
        %v1117 = vrot.slane %v1097, 2
        %v1118 = vsel %vm960, %v1116, %v1117
        %v1119 = vrot.slane %v1098, 2
        %v1120 = vsel %vm960, %v1111, %v1119
        %v1121 = vrot.slane %v1099, 2
        %v1122 = vsel %vm960, %v1114, %v1121
        %v1123 = vrot.slane %v1100, 2
        %v1124 = vsel %vm960, %v1117, %v1123
        %1125 = vrot.lane.b32.xlu0 %v1112, 96
        %v1126 = vpop.permute.xlu0 %1125
        %1127 = vrot.lane.b32.xlu0 %v1115, 96
        %v1128 = vpop.permute.xlu0 %1127
        %1129 = vrot.lane.b32.xlu0 %v1118, 96
        %v1130 = vpop.permute.xlu0 %1129
        %1131 = vrot.lane.b32.xlu0 %v1120, 96
        %v1132 = vpop.permute.xlu0 %1131
        %1133 = vrot.lane.b32.xlu0 %v1122, 96
        %v1134 = vpop.permute.xlu0 %1133
        %1135 = vrot.lane.b32.xlu0 %v1124, 96
        %v1136 = vpop.permute.xlu0 %1135
        %v1137 = vsel %vm696, %v1126, %v1128
        %v1138 = vsel %vm696, %v1128, %v1130
        %v1139 = vsel %vm696, %v1132, %v1134
        %v1140 = vsel %vm696, %v1134, %v1136
        %v1145 = vadd.f32 %v1060, %v1137
        %v1146 = vadd.f32 %v1061, %v1138
        %v1147 = vadd.f32 %v1062, %v1139
        %v1148 = vadd.f32 %v1063, %v1140
        %v1149 = vld [vmem:[%s5] sm:$0x3]
        %v1151 = vlaneseq
        %v1152 = vshrl.u32 %v1151, 7
        %v1153 = vsub.s32 0, %v1152
        %v1154 = vrot.slane %v1149, %v1153
        %v1155 = vlaneseq
        %v1156 = vshrl.u32 %v1155, 7
        %v1157 = vsub.s32 1, %v1156
        %v1158 = vrot.slane %v1149, %v1157
        %v1161 = vadd.f32 %v1145, %v1154
        %v1162 = vadd.f32 %v1146, %v1158
        %v1163 = vadd.f32 %v1147, %v1154
        %v1164 = vadd.f32 %v1148, %v1158
        %vm1165 = vcmp.ge.f32.partialorder %v1161, 0.0
        %vm1166 = vcmp.ge.f32.partialorder %v1162, 0.0
        %vm1167 = vcmp.ge.f32.partialorder %v1163, 0.0
        %vm1168 = vcmp.ge.f32.partialorder %v1164, 0.0
        %v1169 = vld [vmem:[%s6] sm:$0x3]
        %v1171 = vlaneseq
        %v1172 = vshrl.u32 %v1171, 7
        %v1173 = vsub.s32 0, %v1172
        %v1174 = vrot.slane %v1169, %v1173
        %v1175 = vlaneseq
        %v1176 = vshrl.u32 %v1175, 7
        %v1177 = vsub.s32 1, %v1176
        %v1178 = vrot.slane %v1169, %v1177
        %v1181 = vmul.f32 %v1174, %v1161
        %v1182 = vmul.f32 %v1178, %v1162
        %v1183 = vmul.f32 %v1174, %v1163
        %v1184 = vmul.f32 %v1178, %v1164
        %v1185 = vsel %vm1165, %v1161, %v1181
        %v1186 = vsel %vm1166, %v1162, %v1182
        %v1187 = vsel %vm1167, %v1163, %v1183
        %v1188 = vsel %vm1168, %v1164, %v1184
        %v1189 = vld [vmem:[%s7] sm:$0xff]
        %v1190 = vld [vmem:[%s7 + $0x8] sm:$0xff]
        %v1191 = vld [vmem:[%s7 + $0x10] sm:$0xff]
        %v1192 = vld [vmem:[%s7 + $0x18] sm:$0xff]
        %v1193 = vld [vmem:[%s7 + $0x20] sm:$0xff]
        %v1194 = vld [vmem:[%s7 + $0x28] sm:$0xff]
        %v1195 = vld [vmem:[%s7 + $0x30] sm:$0xff]
        %v1196 = vld [vmem:[%s7 + $0x38] sm:$0xff]
        %v1197 = vld [vmem:[%s7 + $0x40] sm:$0xff]
        %v1198 = vld [vmem:[%s7 + $0x48] sm:$0xff]
        %v1199 = vld [vmem:[%s7 + $0x50] sm:$0xff]
        %v1200 = vld [vmem:[%s7 + $0x58] sm:$0xff]
        %v1201 = vld [vmem:[%s7 + $0x60] sm:$0xff]
        %v1202 = vld [vmem:[%s7 + $0x68] sm:$0xff]
        %v1203 = vld [vmem:[%s7 + $0x70] sm:$0xff]
        %v1204 = vld [vmem:[%s7 + $0x78] sm:$0xff]
        %v1205 = vld [vmem:[%s7 + $0x80] sm:$0xff]
        %v1206 = vld [vmem:[%s7 + $0x88] sm:$0xff]
        %v1207 = vld [vmem:[%s7 + $0x90] sm:$0xff]
        %v1208 = vld [vmem:[%s7 + $0x98] sm:$0xff]
        %v1209 = vld [vmem:[%s7 + $0xa0] sm:$0xff]
        %v1210 = vld [vmem:[%s7 + $0xa8] sm:$0xff]
        %v1211 = vld [vmem:[%s7 + $0xb0] sm:$0xff]
        %v1212 = vld [vmem:[%s7 + $0xb8] sm:$0xff]
        %v1213 = vld [vmem:[%s7 + $0xc0] sm:$0xff]
        %v1214 = vld [vmem:[%s7 + $0xc8] sm:$0xff]
        %v1215 = vld [vmem:[%s7 + $0xd0] sm:$0xff]
        %v1216 = vld [vmem:[%s7 + $0xd8] sm:$0xff]
        %v1217 = vld [vmem:[%s7 + $0xe0] sm:$0xff]
        %v1218 = vld [vmem:[%s7 + $0xe8] sm:$0xff]
        %v1219 = vld [vmem:[%s7 + $0xf0] sm:$0xff]
        %v1220 = vld [vmem:[%s7 + $0xf8] sm:$0xff]
        %v1221 = vld [vmem:[%s8] sm:$0x1]
        %v1223 = vlaneseq
        %v1224 = vshrl.u32 %v1223, 7
        %v1225 = vsub.s32 0, %v1224
        %v1226 = vrot.slane %v1221, %v1225
        %1228 = vmatprep.subr.mxu0 0.0
        %1229 = vmatpush1.msra.mxu0 %v1189
        %1230 = vmatprep.subr.mxu0 0.0
        %1231 = vmatpush1.msra.mxu0 %v1190
        %1232 = vmatprep.subr.mxu0 0.0
        %1233 = vmatpush1.msra.mxu0 %v1191
        %1234 = vmatprep.subr.mxu0 0.0
        %1235 = vmatpush1.msra.mxu0 %v1192
        %1236 = vmatprep.subr.mxu0 0.0
        %1237 = vmatpush1.msra.mxu0 %v1193
        %1238 = vmatprep.subr.mxu0 0.0
        %1239 = vmatpush1.msra.mxu0 %v1194
        %1240 = vmatprep.subr.mxu0 0.0
        %1241 = vmatpush1.msra.mxu0 %v1195
        %1242 = vmatprep.subr.mxu0 0.0
        %1243 = vmatpush1.msra.mxu0 %v1196
        %1244 = vmatprep.subr.mxu0 0.0
        %1245 = vmatpush1.msra.mxu0 %v1197
        %1246 = vmatprep.subr.mxu0 0.0
        %1247 = vmatpush1.msra.mxu0 %v1198
        %1248 = vmatprep.subr.mxu0 0.0
        %1249 = vmatpush1.msra.mxu0 %v1199
        %1250 = vmatprep.subr.mxu0 0.0
        %1251 = vmatpush1.msra.mxu0 %v1200
        %1252 = vmatprep.subr.mxu0 0.0
        %1253 = vmatpush1.msra.mxu0 %v1201
        %1254 = vmatprep.subr.mxu0 0.0
        %1255 = vmatpush1.msra.mxu0 %v1202
        %1256 = vmatprep.subr.mxu0 0.0
        %1257 = vmatpush1.msra.mxu0 %v1203
        %1258 = vmatprep.subr.mxu0 0.0
        %1259 = vmatpush1.msra.mxu0 %v1204
        %1260 = vmatprep.subr.mxu0 0.0
        %1261 = vmatpush1.msra.mxu0 %v1205
        %1262 = vmatprep.subr.mxu0 0.0
        %1263 = vmatpush1.msra.mxu0 %v1206
        %1264 = vmatprep.subr.mxu0 0.0
        %1265 = vmatpush1.msra.mxu0 %v1207
        %1266 = vmatprep.subr.mxu0 0.0
        %1267 = vmatpush1.msra.mxu0 %v1208
        %1268 = vmatprep.subr.mxu0 0.0
        %1269 = vmatpush1.msra.mxu0 %v1209
        %1270 = vmatprep.subr.mxu0 0.0
        %1271 = vmatpush1.msra.mxu0 %v1210
        %1272 = vmatprep.subr.mxu0 0.0
        %1273 = vmatpush1.msra.mxu0 %v1211
        %1274 = vmatprep.subr.mxu0 0.0
        %1275 = vmatpush1.msra.mxu0 %v1212
        %1276 = vmatprep.subr.mxu0 0.0
        %1277 = vmatpush1.msra.mxu0 %v1213
        %1278 = vmatprep.subr.mxu0 0.0
        %1279 = vmatpush1.msra.mxu0 %v1214
        %1280 = vmatprep.subr.mxu0 0.0
        %1281 = vmatpush1.msra.mxu0 %v1215
        %1282 = vmatprep.subr.mxu0 0.0
        %1283 = vmatpush1.msra.mxu0 %v1216
        %1284 = vmatprep.subr.mxu0 0.0
        %1285 = vmatpush1.msra.mxu0 %v1217
        %1286 = vmatprep.subr.mxu0 0.0
        %1287 = vmatpush1.msra.mxu0 %v1218
        %1288 = vmatprep.subr.mxu0 0.0
        %1289 = vmatpush1.msra.mxu0 %v1219
        %1290 = vmatprep.subr.mxu0 0.0
        %1291 = vmatpush1.msra.mxu0 %v1220
        %1292 = vmatprep.mubr.f32.mxu0 %v1186
        %1293 = vmatmul.mubr.f32.gmra.mrb[0].mxu0 %v1185
        %v1294 = vpop.f32.mrb[0].mxu0
        %v1295 = vadd.f32 %v1226, %v1294
        %v1296 = vpop.f32.mrb[0].mxu0
        %1297 = vmatprep.mubr.f32.mxu0 %v1188
        %1298 = vmatmul.mubr.f32.gmra.mrb[0].mxu0 %v1187
        %v1299 = vpop.f32.mrb[0].mxu0
        %v1300 = vadd.f32 %v1226, %v1299
        %v1301 = vpop.f32.mrb[0].mxu0
        %1302 = vdwg.mxu0
        %vm1303 = vcmp.ge.f32.partialorder %v1295, 0.0
        %vm1304 = vcmp.ge.f32.partialorder %v1300, 0.0
        %v1305 = vld [vmem:[%s9] sm:$0x1]
        %v1307 = vlaneseq
        %v1308 = vshrl.u32 %v1307, 7
        %v1309 = vsub.s32 0, %v1308
        %v1310 = vrot.slane %v1305, %v1309
        %v1312 = vmul.f32 %v1310, %v1295
        %v1313 = vmul.f32 %v1310, %v1300
        %v1314 = vsel %vm1303, %v1295, %v1312
        %v1315 = vsel %vm1304, %v1300, %v1313
        %v1316 = vadd.f32 %v1314, %v358
        %v1317 = vadd.f32 %v1315, %v359
        %1318 = vst.msk [vmem:[%s352] sm:$0xff] %vm388, %v1316
        %1319 = vst.msk [vmem:[%s352 + $0x8] sm:$0xff] %vm388, %v1317
        %s1320 = sand.u32 %s247, 1
        %s1321 = scalar_lea.sflag [#allocation3], %s1320
        %s1322 = sand.u32 %s247, 1
        %s1323 = smul.addr %s1322, 16
        %s1324 = scalar_lea.vmem [#allocation2], %s1323
        // Predicated region
        $region61: #{tpu_custom_call.1} parent=59 // pred_check
          %p1325 = pneg %p257
        $region62: #{tpu_custom_call.1} parent=59 // pred_check_branch
          %1327 = sbr.rel (%p1325) target = $region64
        $region63: #{tpu_custom_call.1} parent=59 // pred_region
          %s1329 = ssub.s32 256, 256
          %1330 = vsyncadd %s1321, %s1329
          %s1331 = smul.addr %s24, 2
          %s1332 = smul.addr %s1331, 128
          %s1333 = scalar_lea.hbm %s10, %s1332
          %s1334 = sshll.u32 %s1324, 4
          %s1335 = int_to_ptr.vmem [resolvable:$true] %s1334
          %1340 = dma.vmem_to_hbm [thread:$0]  %s1335, 256, %s1333, %s1321, 128, 128, 8
        $region64: #{tpu_custom_call.1} parent=59 // pred_fallthru
          _
      $region60: #{tpu_custom_call.1} parent=5 // pred_fallthru
        _
      %p1341 = scmp.le.s32.totalorder 2, %s19
      // Predicated region
      $region65: #{tpu_custom_call.1} parent=5 // pred_check
        %p1342 = pneg %p1341
      $region66: #{tpu_custom_call.1} parent=5 // pred_check_branch
        %1344 = sbr.rel (%p1342) target = $region68
      $region67: #{tpu_custom_call.1} parent=5 // pred_region
        %s1345 = ssub.s32 %s19, 2
        // Predicated region
        $region69: #{tpu_custom_call.1} parent=67 // pred_check
          %p1346 = pneg %p263
        $region70: #{tpu_custom_call.1} parent=67 // pred_check_branch
          %1348 = sbr.rel (%p1346) target = $region72
        $region71: #{tpu_custom_call.1} parent=67 // pred_region
          %s1349 = sand.u32 %s248, 1
          %s1350 = scalar_lea.sflag [#allocation3], %s1349
          %s1351 = sand.u32 %s248, 1
          %s1352 = smul.addr %s1351, 16
          %s1353 = scalar_lea.vmem [#allocation2], %s1352
          %1354 = dma.done %s1350, 256
        $region72: #{tpu_custom_call.1} parent=67 // pred_fallthru
          _
      $region68: #{tpu_custom_call.1} parent=5 // pred_fallthru
        _
    $region6: #{tpu_custom_call.1} parent=1 // loop_footer
      %s23 = sadd.s32 1, %s19
    $region7: #{tpu_custom_call.1} parent=1 // loop_footer_branch
      %18 = sbr.rel target = $region3
    $region8: #{tpu_custom_call.1} parent=1 // loop_exit
      _
    %1355 = vsyncpa [#allocation3], 1
    %s1356 = scalar_lea.sflag [#allocation3], 1
    %1357 = vsyncpa %s1356, 1

</llo_original>
